<compile_context>
chip_gen: v7x
topology: tpu7x:2x2x1
jax: 0.10.0
libtpu: 0.0.40
codegen_flags: <defaults>
</compile_context>

<pallas_src>
import functools
import math

import jax
import jax.numpy as jnp
from jax.experimental import pallas as pl
from jax.experimental.pallas import tpu as pltpu


# ---------------------------------------------------------------------------
# Buffer construction (mirrors the PyTorch __init__ / register_buffer)
# ---------------------------------------------------------------------------

def make_positional_encoding(max_len, d_model, dtype=jnp.float32):
    """pe[:, 0::2] = sin(pos * div_term); pe[:, 1::2] = cos(pos * div_term)."""
    assert d_model % 2 == 0, "d_model must be even (same as the PyTorch snippet)"
    position = jnp.arange(max_len, dtype=jnp.float32)[:, None]            # (L, 1)
    div_term = jnp.exp(
        jnp.arange(0, d_model, 2, dtype=jnp.float32)
        * (-math.log(10000.0) / d_model))                                 # (D//2,)
    angles = position * div_term                                          # (L, D//2)
    pe = jnp.zeros((max_len, d_model), jnp.float32)
    pe = pe.at[:, 0::2].set(jnp.sin(angles))
    pe = pe.at[:, 1::2].set(jnp.cos(angles))
    return pe.astype(dtype)


# ---------------------------------------------------------------------------
# Pallas kernel: out = x + pe on a lane-dense (tile_t, B*D) block.
#   reps == B when pe arrives un-expanded as (tile_t, D) (D % 128 == 0):
#   the batch replication becomes `reps` lane-aligned chunk adds.
#   reps == 1 when pe already matches the x block (pre-expanded / B == 1).
# ---------------------------------------------------------------------------

def _add_pe_kernel(x_ref, pe_ref, o_ref, *, reps):
    pe = pe_ref[...]                      # (tile_t, cols // reps), native dtype
    d = pe.shape[1]
    for r in range(reps):                 # static, lane-aligned sub-blocks
        sl = slice(r * d, (r + 1) * d)
        o_ref[:, sl] = x_ref[:, sl] + pe


def positional_encoding(x, pe, *, tile_bytes=2 << 20, force_pallas=False,
                        donate_x=False):
    """Forward of PositionalEncoding: x (T, B, D) + pe[:T] broadcast over B."""
    T, B, D = x.shape
    assert pe.shape[0] >= T and pe.shape[1] == D, (pe.shape, x.shape)
    pe_t = pe[:T].astype(x.dtype)                 # == self.pe[:x.size(0)]

    itemsize = jnp.dtype(x.dtype).itemsize
    total_bytes = T * B * D * itemsize

    # Tiny inputs: pallas_call launch + pipeline setup dominate; fused XLA wins.
    if not force_pallas and total_bytes < (1 << 20):
        return x + pe_t[:, None, :]

    # Lane-dense flattened view of x / out.
    cols = B * D
    x2 = x.reshape(T, cols)
    if D % 128 == 0 or B == 1:
        pe2 = pe_t                                # (T, D): replicate in-kernel
    else:
        pe2 = jnp.tile(pe_t, (1, B))              # small-D case: pre-expand once
    pe_cols = pe2.shape[1]
    reps = cols // pe_cols

    # ~2 MiB of x per grid step; sublane-aligned; >= 2 steps when T allows it
    # so dimension_semantics=("parallel",) can shard across v7x's 2 TCs.
    row_bytes = cols * itemsize
    tile_t = min(T, max(1, tile_bytes // row_bytes))
    if T >= 16:
        tile_t = min(tile_t, (((T + 1) // 2) + 7) // 8 * 8)
    if tile_t < T:
        tile_t = max(8, (tile_t // 8) * 8)
    if tile_t >= T:
        tile_t = T                                # full-extent block is legal
    grid = (pl.cdiv(T, tile_t),)

    x_tile_bytes = tile_t * cols * itemsize
    pe_tile_bytes = tile_t * pe_cols * itemsize
    # double-buffered x-in and out, double-buffered pe-in, plus headroom
    needed = 2 * x_tile_bytes + 2 * x_tile_bytes + 2 * pe_tile_bytes
    vmem_limit = int(min(32 << 20, max(8 << 20, 2 * needed)))

    cost = pl.CostEstimate(
        flops=T * cols,
        transcendentals=0,
        bytes_accessed=2 * total_bytes + T * pe_cols * itemsize,
    )

    out2 = pl.pallas_call(
        functools.partial(_add_pe_kernel, reps=reps),
        out_shape=jax.ShapeDtypeStruct((T, cols), x.dtype),
        grid=grid,
        in_specs=[
            pl.BlockSpec((tile_t, cols), lambda i: (i, 0)),
            pl.BlockSpec((tile_t, pe_cols), lambda i: (i, 0)),
        ],
        out_specs=pl.BlockSpec((tile_t, cols), lambda i: (i, 0)),
        input_output_aliases=({0: 0} if donate_x else {}),
        compiler_params=pltpu.CompilerParams(
            dimension_semantics=("parallel",),
            vmem_limit_bytes=vmem_limit,
        ),
        cost_estimate=cost,
    )(x2, pe2)
    return out2.reshape(T, B, D)


# ---------------------------------------------------------------------------
# Module-like wrapper
# ---------------------------------------------------------------------------

class PositionalEncoding:
    def __init__(self, d_model, dropout=0.1, max_len=5000):
        # TODO(synk): dropout (p=0.1) is identity here (eval/inference);
        # training-mode dropout would need pltpu.prng_seed + prng_random_bits.
        self.pe = make_positional_encoding(max_len, d_model)

    def __call__(self, x):
        return positional_encoding(x, self.pe)


if __name__ == "__main__":
    MAX_LEN = 5000

    key = jax.random.PRNGKey(0)
    k1, k2 = jax.random.split(key)

    # --- Toy shape from the spec (T=8, B=2, D=32): force the Pallas path so
    # --- the kernel itself is exercised (auto-dispatch would use plain XLA).
    T, B, D_MODEL = 8, 2, 32
    x_small = jax.random.normal(k1, (T, B, D_MODEL), dtype=jnp.float32)
    module = PositionalEncoding(D_MODEL, dropout=0.1, max_len=MAX_LEN)

    fwd_forced = jax.jit(functools.partial(positional_encoding, force_pallas=True))
    out_small = fwd_forced(x_small, module.pe)
    jax.block_until_ready(out_small)
    ref_small = x_small + module.pe[:T][:, None, :]
    assert out_small.shape == x_small.shape, out_small.shape
    assert jnp.all(jnp.isfinite(out_small))
    assert jnp.allclose(out_small, ref_small, atol=1e-6, rtol=1e-6), float(
        jnp.max(jnp.abs(out_small - ref_small)))

    # --- Lane-dense realistic shape (D % 128 == 0): exercises the multi-tile
    # --- grid (>=2 steps) and the in-kernel batch replication path.
    T2, B2, D2 = 2048, 4, 128
    x_big = jax.random.normal(k2, (T2, B2, D2), dtype=jnp.float32)
    module2 = PositionalEncoding(D2, dropout=0.1, max_len=MAX_LEN)

    fwd = jax.jit(positional_encoding)
    out_big = fwd(x_big, module2.pe)
    jax.block_until_ready(out_big)
    ref_big = x_big + module2.pe[:T2][:, None, :]
    assert out_big.shape == x_big.shape, out_big.shape
    assert jnp.allclose(out_big, ref_big, atol=1e-6, rtol=1e-6), float(
        jnp.max(jnp.abs(out_big - ref_big)))

    print("KERNEL_OK")
</pallas_src>

<mosaic_0001>
module attributes {stable_mosaic.version = 11 : i64} {
  func.func @_add_pe_kernel(%arg0: i32, %arg1: memref<8x64xf32, #tpu.memory_space<vmem>>, %arg2: memref<8x64xf32, #tpu.memory_space<vmem>>, %arg3: memref<8x64xf32, #tpu.memory_space<vmem>>) attributes {dimension_semantics = [#tpu.dimension_semantics<parallel>], iteration_bounds = array<i64: 1>, scalar_prefetch = 0 : i64, scratch_operands = 0 : i64, tpu.core_type = #tpu.core_type<tc>, window_params = [{transform_indices = @transform_0, window_bounds = array<i64: 8, 64>}, {transform_indices = @transform_1, window_bounds = array<i64: 8, 64>}, {transform_indices = @transform_2, window_bounds = array<i64: 8, 64>}]} {
    %c0 = arith.constant 0 : index
    %c0_0 = arith.constant 0 : index
    %0 = vector.load %arg2[%c0, %c0_0] : memref<8x64xf32, #tpu.memory_space<vmem>>, vector<8x64xf32>
    %c0_1 = arith.constant 0 : index
    %c0_2 = arith.constant 0 : index
    %1 = vector.load %arg1[%c0_1, %c0_2] : memref<8x64xf32, #tpu.memory_space<vmem>>, vector<8x64xf32>
    %2 = arith.addf %1, %0 : vector<8x64xf32>
    %c0_3 = arith.constant 0 : index
    %c0_4 = arith.constant 0 : index
    %3 = vector.load %arg3[%c0_3, %c0_4] : memref<8x64xf32, #tpu.memory_space<vmem>>, vector<8x64xf32>
    tpu.vector_store %arg3[%c0_3, %c0_4], %2 {strides = array<i32>} : memref<8x64xf32, #tpu.memory_space<vmem>>, vector<8x64xf32>,
    return
  }
  func.func @transform_0(%arg0: i32) -> (i32, i32) {
    %c0_i32 = arith.constant 0 : i32
    %c0_i32_0 = arith.constant 0 : i32
    return %arg0, %c0_i32 : i32, i32
  }
  func.func @transform_1(%arg0: i32) -> (i32, i32) {
    %c0_i32 = arith.constant 0 : i32
    %c0_i32_0 = arith.constant 0 : i32
    return %arg0, %c0_i32 : i32, i32
  }
  func.func @transform_2(%arg0: i32) -> (i32, i32) {
    %c0_i32 = arith.constant 0 : i32
    %c0_i32_0 = arith.constant 0 : i32
    return %arg0, %c0_i32 : i32, i32
  }
}

</mosaic_0001>

<llo_original>
// kernel: tile.9
$region0: #{tile.9}
  %s0 = inlined_call_operand.vmem [shape: f32[8,2,32], index: 0, kind: input, shape index: {}]
  %s1 = inlined_call_operand.vmem [shape: f32[8,64], index: 1, kind: output, shape index: {}]
  $region1: #{tile.9} parent=0
    #allocation0 [shape = 'u8[32768]{0}', space=vmem, size = 0x8000, scoped, tag = 'scoped mem for input reshape']
    %s3 = sshllo.u32 0, 2
    %s4 = smul.addr 2, 7
    %s5 = scalar_lea.vmem %s0, %s4
    %v6 = vld [vmem:[%s5] sm:%s3]
    %s7 = scalar_lea.vmem [#allocation0], 56
    %8 = vst [vmem:[%s7] sm:%s3] %v6
    %s9 = smul.addr 2, 6
    %s10 = scalar_lea.vmem %s0, %s9
    %v11 = vld [vmem:[%s10] sm:%s3]
    %s12 = scalar_lea.vmem [#allocation0], 48
    %13 = vst [vmem:[%s12] sm:%s3] %v11
    %s14 = smul.addr 2, 5
    %s15 = scalar_lea.vmem %s0, %s14
    %v16 = vld [vmem:[%s15] sm:%s3]
    %s17 = scalar_lea.vmem [#allocation0], 40
    %18 = vst [vmem:[%s17] sm:%s3] %v16
    %s19 = smul.addr 2, 4
    %s20 = scalar_lea.vmem %s0, %s19
    %v21 = vld [vmem:[%s20] sm:%s3]
    %s22 = scalar_lea.vmem [#allocation0], 32
    %23 = vst [vmem:[%s22] sm:%s3] %v21
    %s24 = smul.addr 2, 3
    %s25 = scalar_lea.vmem %s0, %s24
    %v26 = vld [vmem:[%s25] sm:%s3]
    %s27 = scalar_lea.vmem [#allocation0], 24
    %28 = vst [vmem:[%s27] sm:%s3] %v26
    %s29 = smul.addr 2, 2
    %s30 = scalar_lea.vmem %s0, %s29
    %v31 = vld [vmem:[%s30] sm:%s3]
    %s32 = scalar_lea.vmem [#allocation0], 16
    %33 = vst [vmem:[%s32] sm:%s3] %v31
    %s34 = scalar_lea.vmem %s0, 2
    %v35 = vld [vmem:[%s34] sm:%s3]
    %s36 = scalar_lea.vmem [#allocation0], 8
    %37 = vst [vmem:[%s36] sm:%s3] %v35
    %v38 = vld [vmem:[%s0] sm:%s3]
    %39 = vst [vmem:[#allocation0] sm:%s3] %v38
    %v40 = vld [vmem:[#allocation0] ss:$8 sm:$0xf]
    %v41 = vld [vmem:[#allocation0] ss:$8 sm:$0xf0]
    %vm42 = vcmask 1047556
    %v43 = vsel %vm42, %v41, %v40
    %vm44 = vcmask 261120
    %45 = vst.msk [vmem:[%s1] sm:$0xff] %vm44, %v43
    %s46 = scalar_lea.vmem [#allocation0], 1
    %v47 = vld [vmem:[%s46] ss:$8 sm:$0xf]
    %s48 = scalar_lea.vmem [#allocation0], 1
    %v49 = vld [vmem:[%s48] ss:$8 sm:$0xf0]
    %vm50 = vcmask 1047556
    %v51 = vsel %vm50, %v49, %v47
    %52 = vrot.lane.b32.xlu0 %v51, 32
    %v53 = vpop.permute.xlu0 %52
    %vm54 = vcmask 523520
    %55 = vst.msk [vmem:[%s1] sm:$0xff] %vm54, %v53

// kernel: positional_encoding.1
$region0: #{positional_encoding.1}
  #allocation0 [shape = 'u32[]', space=smem, size = 0x4, offset = 0x4, fixed_abs, tag = 'smem constant byte address 0x4 - core index']
  #allocation1 [shape = 'u32[144,128]{1,0:T(1,128)}', space=vmem, size = 0x12000, scoped, tag = 'internal scratch']
  %s0 = inlined_call_operand.vmem [shape: f32[8,64], index: 0, kind: input, shape index: {}]
  %s1 = inlined_call_operand.vmem [shape: f32[8,64], index: 1, kind: input, shape index: {}]
  %s2 = inlined_call_operand.vmem [shape: f32[8,64], index: 2, kind: output, shape index: {}]
  %s3 = sld [smem:[#allocation0]]
  $region18: #{positional_encoding.1} parent=0
    _
  %s5 = ssub.s32 1, %s3
  %s6 = scalar_select 0, %s5, %s3
  // Predicated region
  $region2: #{positional_encoding.1} parent=0 // pred_check
    _
  $region3: #{positional_encoding.1} parent=0 // pred_check_branch
    %8 = sbr.rel (0) target = $region5
  $region4: #{positional_encoding.1} parent=0 // pred_region
    _
  $region5: #{positional_encoding.1} parent=0 // pred_fallthru
    _
  // Predicated region
  $region6: #{positional_encoding.1} parent=0 // pred_check
    _
  $region7: #{positional_encoding.1} parent=0 // pred_check_branch
    %10 = sbr.rel (0) target = $region9
  $region8: #{positional_encoding.1} parent=0 // pred_region
    _
  $region9: #{positional_encoding.1} parent=0 // pred_fallthru
    _
  %v11 = vld [vmem:[%s1] sm:$0xff]
  %v12 = vld [vmem:[%s0] sm:$0xff]
  %v13 = vadd.f32 %v12, %v11
  %vm14 = vcmask 523264
  %15 = vst.msk [vmem:[%s2] sm:$0xff] %vm14, %v13
  // Predicated region
  $region10: #{positional_encoding.1} parent=0 // pred_check
    _
  $region11: #{positional_encoding.1} parent=0 // pred_check_branch
    %17 = sbr.rel (0) target = $region13
  $region12: #{positional_encoding.1} parent=0 // pred_region
    _
  $region13: #{positional_encoding.1} parent=0 // pred_fallthru
    _
  // Predicated region
  $region14: #{positional_encoding.1} parent=0 // pred_check
    _
  $region15: #{positional_encoding.1} parent=0 // pred_check_branch
    %19 = sbr.rel (0) target = $region17
  $region16: #{positional_encoding.1} parent=0 // pred_region
    _
  $region17: #{positional_encoding.1} parent=0 // pred_fallthru
    _

</llo_original>
